<compile_context>
chip_gen: v5e
topology: v5e:2x2
jax: 0.10.0
libtpu: 0.0.40
codegen_flags: <defaults>
</compile_context>

<pallas_src>
import functools

import jax
import jax.numpy as jnp
import numpy as np
from jax.experimental import pallas as pl
from jax.experimental.pallas import tpu as pltpu


# --------------------------------------------------------------------------- #
# Host-side weight preparation
# --------------------------------------------------------------------------- #
def _banded_conv_weights(w_hwio, W):
    """(KH, KW, Ci, Co) HWIO -> (KH, W*Ci, W*Co) block-banded matrices (one per kh).

    banded[kh][wi*Ci+ci, wo*Co+co] = w[kh, wi-wo+1, ci, co] when the tap is in range,
    else 0 — i.e. the W-direction SAME zero padding is absorbed into the band.
    """
    KH, KW, Ci, Co = w_hwio.shape
    sel = np.zeros((KW, W, W), np.float32)  # [kw, w_in, w_out]
    for kw in range(KW):
        for wo in range(W):
            wi = wo + kw - (KW // 2)
            if 0 <= wi < W:
                sel[kw, wi, wo] = 1.0
    banded = jnp.einsum("kvw,hkio->hviwo", sel, w_hwio)  # (KH, W, Ci, W, Co)
    return banded.reshape(KH, W * Ci, W * Co)


def residual9_prepare(w1, s1, b1, w2, s2, b2, W, mxu_dtype=jnp.float32):
    """Fold BN scales into stacked block-banded conv weights (done once, host side).

    Returns (w1s, b1t, w2s, b2t):
      w*s: (3*W*Ci, W*Co) stacked banded weights with BN scale folded into columns.
      b*t: (1, W*Co) BN bias tiled over W.
    """
    w1b = _banded_conv_weights(w1, W) * jnp.tile(s1, W)[None, None, :]
    w2b = _banded_conv_weights(w2, W) * jnp.tile(s2, W)[None, None, :]
    w1s = w1b.reshape(-1, w1b.shape[-1]).astype(mxu_dtype)   # (3*W*Ci, W*Co)
    w2s = w2b.reshape(-1, w2b.shape[-1]).astype(mxu_dtype)
    b1t = jnp.tile(b1, W).reshape(1, -1).astype(jnp.float32)
    b2t = jnp.tile(b2, W).reshape(1, -1).astype(jnp.float32)
    return w1s, b1t, w2s, b2t


# --------------------------------------------------------------------------- #
# Kernel
# --------------------------------------------------------------------------- #
def _residual9_kernel(x_ref, w1_ref, b1_ref, w2_ref, b2_ref, out_ref, *,
                      img_h, mxu_dtype):
    # x_ref   : (M, W*C)       lane-dense rows; M is a multiple of img_h
    # w*_ref  : (3*W*C, W*C)   stacked block-banded conv weights (BN scale folded)
    # b*_ref  : (1, W*C)       BN bias tiled over W
    # out_ref : (M, W*C)
    m, wc = x_ref.shape
    x = x_ref[...].astype(jnp.float32)

    # Per-image H boundary masks (supports several batch images stacked along rows).
    row = jax.lax.broadcasted_iota(jnp.int32, (m, wc), 0) % img_h
    top = row == 0
    bot = row == (img_h - 1)

    def conv3x3(v, w_ref):
        # Row shifts via XLU roll + boundary zeroing; one K=3*W*C MXU contraction.
        v_up = jnp.where(top, 0.0, pltpu.roll(v, 1, axis=0))       # v_up[r] = v[r-1]
        v_dn = jnp.where(bot, 0.0, pltpu.roll(v, m - 1, axis=0))   # v_dn[r] = v[r+1]
        v_stack = jnp.concatenate([v_up, v, v_dn], axis=1).astype(mxu_dtype)
        return jnp.dot(v_stack, w_ref[...], preferred_element_type=jnp.float32)

    y = jnp.maximum(conv3x3(x, w1_ref) + b1_ref[...], 0.0)   # conv1 (+BN scale folded) + bias + ReLU
    y = conv3x3(y, w2_ref) + b2_ref[...]                      # conv2 (+BN scale folded) + bias
    out_ref[...] = jnp.maximum(x + y, 0.0).astype(out_ref.dtype)  # residual + ReLU (full-width store)


# --------------------------------------------------------------------------- #
# pallas_call wrappers
# --------------------------------------------------------------------------- #
def _num_tensorcores():
    """TensorCores sharing one Pallas grid on this chip (v7x/v4/v5p = 2, else 1)."""
    try:
        kind = jax.devices()[0].device_kind.lower()
    except Exception:
        return 1
    return 2 if any(tag in kind for tag in ("v7", "v4", "v5p")) else 1


def residual9_pallas_rows(x_rows, w1s, b1t, w2s, b2t, *, img_h,
                          batch_tiles=None, mxu_dtype=jnp.float32):
    """x_rows: (N*H, W*C) lane-dense activations (f32). Returns (N*H, W*C) f32."""
    m_total, wc = x_rows.shape
    n = m_total // img_h

    if batch_tiles is None:
        batch_tiles = min(n, _num_tensorcores())   # 1 step on v5e/v6e, 2 on v7x
    while batch_tiles > 1 and (n % batch_tiles or ((n // batch_tiles) * img_h) % 8):
        batch_tiles -= 1
    m_tile = (n // batch_tiles) * img_h

    # VMEM footprint: invariants single-buffered, in/out blocks double-buffered.
    itemsize = jnp.dtype(mxu_dtype).itemsize
    w_bytes = (w1s.size + w2s.size) * itemsize
    io_bytes = 2 * 2 * m_tile * wc * 4
    try:
        vmem_cap = int(pltpu.get_tpu_info().vmem_capacity_bytes)
    except Exception:
        vmem_cap = 64 << 20                         # v7x per-TC floor
    vmem_limit = int(min(w_bytes + io_bytes + (8 << 20), int(vmem_cap * 0.9)))

    kernel = functools.partial(_residual9_kernel, img_h=img_h, mxu_dtype=mxu_dtype)

    def build(use_buffered):
        def inv_spec(shape):
            kw = {"pipeline_mode": pl.Buffered(1)} if use_buffered else {}
            return pl.BlockSpec(shape, lambda g: (0, 0), **kw)

        return pl.pallas_call(
            kernel,
            out_shape=jax.ShapeDtypeStruct((m_total, wc), jnp.float32),
            grid_spec=pltpu.PrefetchScalarGridSpec(
                num_scalar_prefetch=0,
                grid=(batch_tiles,),
                in_specs=[
                    pl.BlockSpec((m_tile, wc), lambda g: (g, 0)),
                    inv_spec(w1s.shape),
                    inv_spec(b1t.shape),
                    inv_spec(w2s.shape),
                    inv_spec(b2t.shape),
                ],
                out_specs=pl.BlockSpec((m_tile, wc), lambda g: (g, 0)),
            ),
            compiler_params=pltpu.CompilerParams(
                dimension_semantics=("parallel",),
                vmem_limit_bytes=vmem_limit),
        )

    # Single-buffer the grid-invariant operands; fall back gracefully if this jax
    # build rejects pipeline_mode / buffer_count=1.
    try:
        out = build(True)(x_rows, w1s, b1t, w2s, b2t)
        return jax.block_until_ready(out)
    except Exception:
        out = build(False)(x_rows, w1s, b1t, w2s, b2t)
        return jax.block_until_ready(out)


def residual9_pallas_nhwc(x_nhwc, w1, s1, b1, w2, s2, b2, *,
                          mxu_dtype=jnp.float32, batch_tiles=None):
    """Primary entry point: NHWC activations (lane-dense, no transposes)."""
    n, h, w, c = x_nhwc.shape
    w1s, b1t, w2s, b2t = residual9_prepare(w1, s1, b1, w2, s2, b2, w, mxu_dtype)
    x_rows = x_nhwc.reshape(n * h, w * c)          # contiguous -> free layout change
    out = residual9_pallas_rows(x_rows, w1s, b1t, w2s, b2t, img_h=h,
                                batch_tiles=batch_tiles, mxu_dtype=mxu_dtype)
    return out.reshape(n, h, w, c)


def residual9_pallas_nchw(x_nchw, w1, s1, b1, w2, s2, b2, **kw):
    """PyTorch-parity wrapper (NCHW). The transposes here are HBM round trips —
    prefer residual9_pallas_nhwc / residual9_pallas_rows in a real pipeline."""
    x_nhwc = jnp.transpose(x_nchw, (0, 2, 3, 1))
    out = residual9_pallas_nhwc(x_nhwc, w1, s1, b1, w2, s2, b2, **kw)
    return jnp.transpose(out, (0, 3, 1, 2))


# --------------------------------------------------------------------------- #
# Pure-JAX reference (inference-mode BN), NCHW like the PyTorch module
# --------------------------------------------------------------------------- #
def residual9_reference(x_nchw, w1, s1, b1, w2, s2, b2):
    dn = ("NCHW", "HWIO", "NCHW")
    y = jax.lax.conv_general_dilated(x_nchw, w1, (1, 1), "SAME", dimension_numbers=dn)
    y = y * s1[None, :, None, None] + b1[None, :, None, None]
    y = jnp.maximum(y, 0.0)
    y = jax.lax.conv_general_dilated(y, w2, (1, 1), "SAME", dimension_numbers=dn)
    y = y * s2[None, :, None, None] + b2[None, :, None, None]
    return jnp.maximum(x_nchw + y, 0.0)


if __name__ == "__main__":
    # Residual add requires Cin == Cout; W*C = 128 makes the layout fully lane-dense.
    N, C, H, W = 2, 8, 16, 16
    key = jax.random.PRNGKey(0)
    kx, kw1, kw2, kg1, kb1, km1, kv1, kg2, kb2, km2, kv2 = jax.random.split(key, 11)

    x_nhwc = jax.random.normal(kx, (N, H, W, C), jnp.float32)
    x_nchw = jnp.transpose(x_nhwc, (0, 3, 1, 2))

    # Conv weights in HWIO layout (PyTorch OIHW -> transpose (2, 3, 1, 0)).
    w1 = jax.random.normal(kw1, (3, 3, C, C), jnp.float32) * 0.1
    w2 = jax.random.normal(kw2, (3, 3, C, C), jnp.float32) * 0.1

    # BatchNorm (inference mode): fold running stats into per-channel scale / bias.
    eps = 1e-5
    g1 = 1.0 + 0.1 * jax.random.normal(kg1, (C,), jnp.float32)
    be1 = 0.1 * jax.random.normal(kb1, (C,), jnp.float32)
    m1 = 0.1 * jax.random.normal(km1, (C,), jnp.float32)
    v1 = jnp.abs(jax.random.normal(kv1, (C,), jnp.float32)) + 0.5
    g2 = 1.0 + 0.1 * jax.random.normal(kg2, (C,), jnp.float32)
    be2 = 0.1 * jax.random.normal(kb2, (C,), jnp.float32)
    m2 = 0.1 * jax.random.normal(km2, (C,), jnp.float32)
    v2 = jnp.abs(jax.random.normal(kv2, (C,), jnp.float32)) + 0.5

    s1 = g1 / jnp.sqrt(v1 + eps)
    b1 = be1 - m1 * s1
    s2 = g2 / jnp.sqrt(v2 + eps)
    b2 = be2 - m2 * s2

    ref_nchw = jax.block_until_ready(residual9_reference(x_nchw, w1, s1, b1, w2, s2, b2))

    # Primary lane-dense NHWC path (no transposes around the kernel).
    out_nhwc = jax.block_until_ready(residual9_pallas_nhwc(x_nhwc, w1, s1, b1, w2, s2, b2))
    assert out_nhwc.shape == (N, H, W, C)
    out_nhwc_as_nchw = jnp.transpose(out_nhwc, (0, 3, 1, 2))
    err_nhwc = float(jnp.max(jnp.abs(out_nhwc_as_nchw - ref_nchw)))
    assert jnp.allclose(out_nhwc_as_nchw, ref_nchw, atol=1e-4, rtol=1e-4), err_nhwc

    # PyTorch-parity NCHW wrapper.
    out_nchw = jax.block_until_ready(residual9_pallas_nchw(x_nchw, w1, s1, b1, w2, s2, b2))
    assert out_nchw.shape == (N, C, H, W)
    err_nchw = float(jnp.max(jnp.abs(out_nchw - ref_nchw)))
    assert jnp.allclose(out_nchw, ref_nchw, atol=1e-4, rtol=1e-4), err_nchw

    print("KERNEL_OK")
</pallas_src>

<mosaic_0001>
module attributes {stable_mosaic.version = 11 : i64} {
  func.func @_residual9_kernel(%arg0: i32, %arg1: memref<32x128xf32, #tpu.memory_space<vmem>>, %arg2: memref<384x128xf32, #tpu.memory_space<vmem>>, %arg3: memref<1x128xf32, #tpu.memory_space<vmem>>, %arg4: memref<384x128xf32, #tpu.memory_space<vmem>>, %arg5: memref<1x128xf32, #tpu.memory_space<vmem>>, %arg6: memref<32x128xf32, #tpu.memory_space<vmem>>) attributes {dimension_semantics = [#tpu.dimension_semantics<parallel>], iteration_bounds = array<i64: 1>, scalar_prefetch = 0 : i64, scratch_operands = 0 : i64, tpu.core_type = #tpu.core_type<tc>, window_params = [{transform_indices = @transform_0, window_bounds = array<i64: 32, 128>}, {pipeline_mode = #tpu.pipeline_mode<synchronous>, transform_indices = @transform_1, window_bounds = array<i64: 384, 128>}, {pipeline_mode = #tpu.pipeline_mode<synchronous>, transform_indices = @transform_2, window_bounds = array<i64: 1, 128>}, {pipeline_mode = #tpu.pipeline_mode<synchronous>, transform_indices = @transform_3, window_bounds = array<i64: 384, 128>}, {pipeline_mode = #tpu.pipeline_mode<synchronous>, transform_indices = @transform_4, window_bounds = array<i64: 1, 128>}, {transform_indices = @transform_5, window_bounds = array<i64: 32, 128>}]} {
    %c0 = arith.constant 0 : index
    %c0_0 = arith.constant 0 : index
    %0 = vector.load %arg1[%c0, %c0_0] : memref<32x128xf32, #tpu.memory_space<vmem>>, vector<32x128xf32>
    %1 = tpu.iota {dimensions = array<i32: 0>} : vector<32x128xi32>
    %c16_i32 = arith.constant 16 : i32
    %c0_i32 = arith.constant 0 : i32
    %2 = arith.cmpi eq, %c16_i32, %c0_i32 : i32
    %c1_i32 = arith.constant 1 : i32
    %3 = arith.select %2, %c1_i32, %c16_i32 : i32
    %4 = vector.broadcast %3 : i32 to vector<32x128xi32>
    %5 = arith.remsi %1, %4 : vector<32x128xi32>
    %c0_i32_1 = arith.constant 0 : i32
    %6 = vector.broadcast %c0_i32_1 : i32 to vector<32x128xi32>
    %7 = arith.cmpi ne, %5, %6 : vector<32x128xi32>
    %c0_i32_2 = arith.constant 0 : i32
    %8 = vector.broadcast %c0_i32_2 : i32 to vector<32x128xi32>
    %9 = arith.cmpi slt, %5, %8 : vector<32x128xi32>
    %c0_i32_3 = arith.constant 0 : i32
    %10 = arith.cmpi slt, %3, %c0_i32_3 : i32
    %11 = vector.broadcast %10 : i1 to vector<32x128xi1>
    %12 = vector.broadcast %11 : vector<32x128xi1> to vector<32x128xi1>
    %13 = arith.xori %9, %12 : vector<32x128xi1>
    %14 = arith.andi %13, %7 : vector<32x128xi1>
    %15 = vector.broadcast %3 : i32 to vector<32x128xi32>
    %16 = arith.addi %5, %15 : vector<32x128xi32>
    %17 = arith.select %14, %16, %5 : vector<32x128xi1>, vector<32x128xi32>
    %c0_i32_4 = arith.constant 0 : i32
    %18 = vector.broadcast %c0_i32_4 : i32 to vector<32x128xi32>
    %19 = arith.cmpi eq, %17, %18 : vector<32x128xi32>
    %c15_i32 = arith.constant 15 : i32
    %20 = vector.broadcast %c15_i32 : i32 to vector<32x128xi32>
    %21 = arith.cmpi eq, %17, %20 : vector<32x128xi32>
    %c1_i32_5 = arith.constant 1 : i32
    %22 = tpu.dynamic_rotate %0 by %c1_i32_5 dim 0 : vector<32x128xf32>, i32 -> vector<32x128xf32>
    %cst = arith.constant 0.000000e+00 : f32
    %23 = vector.broadcast %cst : f32 to vector<32x128xf32>
    %24 = arith.select %19, %23, %22 : vector<32x128xi1>, vector<32x128xf32>
    %c31_i32 = arith.constant 31 : i32
    %25 = tpu.dynamic_rotate %0 by %c31_i32 dim 0 : vector<32x128xf32>, i32 -> vector<32x128xf32>
    %cst_6 = arith.constant 0.000000e+00 : f32
    %26 = vector.broadcast %cst_6 : f32 to vector<32x128xf32>
    %27 = arith.select %21, %26, %25 : vector<32x128xi1>, vector<32x128xf32>
    %28 = tpu.concatenate %24, %0, %27 in 1 : vector<32x128xf32>, vector<32x128xf32>, vector<32x128xf32> -> vector<32x384xf32>
    %c0_7 = arith.constant 0 : index
    %c0_8 = arith.constant 0 : index
    %29 = vector.load %arg2[%c0_7, %c0_8] : memref<384x128xf32, #tpu.memory_space<vmem>>, vector<384x128xf32>
    %cst_9 = arith.constant dense<0.000000e+00> : vector<32x128xf32>
    %30 = tpu.matmul %28, %29, %cst_9 {dimension_numbers = #tpu.dot_dimension_numbers<[1], [0], [0], [1], [0, 0, 1, 1], [], []>} : vector<32x384xf32>, vector<384x128xf32>, vector<32x128xf32> -> vector<32x128xf32>
    %c0_10 = arith.constant 0 : index
    %c0_11 = arith.constant 0 : index
    %31 = vector.load %arg3[%c0_10, %c0_11] : memref<1x128xf32, #tpu.memory_space<vmem>>, vector<1x128xf32>
    %32 = vector.broadcast %31 : vector<1x128xf32> to vector<32x128xf32>
    %33 = arith.addf %30, %32 : vector<32x128xf32>
    %cst_12 = arith.constant 0.000000e+00 : f32
    %34 = vector.broadcast %cst_12 : f32 to vector<32x128xf32>
    %35 = arith.maximumf %33, %34 : vector<32x128xf32>
    %c1_i32_13 = arith.constant 1 : i32
    %36 = tpu.dynamic_rotate %35 by %c1_i32_13 dim 0 : vector<32x128xf32>, i32 -> vector<32x128xf32>
    %cst_14 = arith.constant 0.000000e+00 : f32
    %37 = vector.broadcast %cst_14 : f32 to vector<32x128xf32>
    %38 = arith.select %19, %37, %36 : vector<32x128xi1>, vector<32x128xf32>
    %c31_i32_15 = arith.constant 31 : i32
    %39 = tpu.dynamic_rotate %35 by %c31_i32_15 dim 0 : vector<32x128xf32>, i32 -> vector<32x128xf32>
    %cst_16 = arith.constant 0.000000e+00 : f32
    %40 = vector.broadcast %cst_16 : f32 to vector<32x128xf32>
    %41 = arith.select %21, %40, %39 : vector<32x128xi1>, vector<32x128xf32>
    %42 = tpu.concatenate %38, %35, %41 in 1 : vector<32x128xf32>, vector<32x128xf32>, vector<32x128xf32> -> vector<32x384xf32>
    %c0_17 = arith.constant 0 : index
    %c0_18 = arith.constant 0 : index
    %43 = vector.load %arg4[%c0_17, %c0_18] : memref<384x128xf32, #tpu.memory_space<vmem>>, vector<384x128xf32>
    %cst_19 = arith.constant dense<0.000000e+00> : vector<32x128xf32>
    %44 = tpu.matmul %42, %43, %cst_19 {dimension_numbers = #tpu.dot_dimension_numbers<[1], [0], [0], [1], [0, 0, 1, 1], [], []>} : vector<32x384xf32>, vector<384x128xf32>, vector<32x128xf32> -> vector<32x128xf32>
    %c0_20 = arith.constant 0 : index
    %c0_21 = arith.constant 0 : index
    %45 = vector.load %arg5[%c0_20, %c0_21] : memref<1x128xf32, #tpu.memory_space<vmem>>, vector<1x128xf32>
    %46 = vector.broadcast %45 : vector<1x128xf32> to vector<32x128xf32>
    %47 = arith.addf %44, %46 : vector<32x128xf32>
    %48 = arith.addf %0, %47 : vector<32x128xf32>
    %cst_22 = arith.constant 0.000000e+00 : f32
    %49 = vector.broadcast %cst_22 : f32 to vector<32x128xf32>
    %50 = arith.maximumf %48, %49 : vector<32x128xf32>
    %c0_23 = arith.constant 0 : index
    %c0_24 = arith.constant 0 : index
    %51 = vector.load %arg6[%c0_23, %c0_24] : memref<32x128xf32, #tpu.memory_space<vmem>>, vector<32x128xf32>
    tpu.vector_store %arg6[%c0_23, %c0_24], %50 {strides = array<i32>} : memref<32x128xf32, #tpu.memory_space<vmem>>, vector<32x128xf32>,
    return
  }
  func.func @transform_0(%arg0: i32) -> (i32, i32) {
    %c0_i32 = arith.constant 0 : i32
    %c0_i32_0 = arith.constant 0 : i32
    return %arg0, %c0_i32 : i32, i32
  }
  func.func @transform_1(%arg0: i32) -> (i32, i32) {
    %c0_i32 = arith.constant 0 : i32
    %c0_i32_0 = arith.constant 0 : i32
    %c0_i32_1 = arith.constant 0 : i32
    return %c0_i32, %c0_i32_0 : i32, i32
  }
  func.func @transform_2(%arg0: i32) -> (i32, i32) {
    %c0_i32 = arith.constant 0 : i32
    %c0_i32_0 = arith.constant 0 : i32
    %c0_i32_1 = arith.constant 0 : i32
    return %c0_i32, %c0_i32_0 : i32, i32
  }
  func.func @transform_3(%arg0: i32) -> (i32, i32) {
    %c0_i32 = arith.constant 0 : i32
    %c0_i32_0 = arith.constant 0 : i32
    %c0_i32_1 = arith.constant 0 : i32
    return %c0_i32, %c0_i32_0 : i32, i32
  }
  func.func @transform_4(%arg0: i32) -> (i32, i32) {
    %c0_i32 = arith.constant 0 : i32
    %c0_i32_0 = arith.constant 0 : i32
    %c0_i32_1 = arith.constant 0 : i32
    return %c0_i32, %c0_i32_0 : i32, i32
  }
  func.func @transform_5(%arg0: i32) -> (i32, i32) {
    %c0_i32 = arith.constant 0 : i32
    %c0_i32_0 = arith.constant 0 : i32
    return %arg0, %c0_i32 : i32, i32
  }
}

module attributes {stable_mosaic.version = 11 : i64} {
  func.func @_residual9_kernel(%arg0: i32, %arg1: memref<32x128xf32, #tpu.memory_space<vmem>>, %arg2: memref<384x128xf32, #tpu.memory_space<vmem>>, %arg3: memref<1x128xf32, #tpu.memory_space<vmem>>, %arg4: memref<384x128xf32, #tpu.memory_space<vmem>>, %arg5: memref<1x128xf32, #tpu.memory_space<vmem>>, %arg6: memref<32x128xf32, #tpu.memory_space<vmem>>) attributes {dimension_semantics = [#tpu.dimension_semantics<parallel>], iteration_bounds = array<i64: 1>, scalar_prefetch = 0 : i64, scratch_operands = 0 : i64, tpu.core_type = #tpu.core_type<tc>, window_params = [{transform_indices = @transform_0, window_bounds = array<i64: 32, 128>}, {pipeline_mode = #tpu.pipeline_mode<synchronous>, transform_indices = @transform_1, window_bounds = array<i64: 384, 128>}, {pipeline_mode = #tpu.pipeline_mode<synchronous>, transform_indices = @transform_2, window_bounds = array<i64: 1, 128>}, {pipeline_mode = #tpu.pipeline_mode<synchronous>, transform_indices = @transform_3, window_bounds = array<i64: 384, 128>}, {pipeline_mode = #tpu.pipeline_mode<synchronous>, transform_indices = @transform_4, window_bounds = array<i64: 1, 128>}, {transform_indices = @transform_5, window_bounds = array<i64: 32, 128>}]} {
    %c0 = arith.constant 0 : index
    %c0_0 = arith.constant 0 : index
    %0 = vector.load %arg1[%c0, %c0_0] : memref<32x128xf32, #tpu.memory_space<vmem>>, vector<32x128xf32>
    %1 = tpu.iota {dimensions = array<i32: 0>} : vector<32x128xi32>
    %c16_i32 = arith.constant 16 : i32
    %c0_i32 = arith.constant 0 : i32
    %2 = arith.cmpi eq, %c16_i32, %c0_i32 : i32
    %c1_i32 = arith.constant 1 : i32
    %3 = arith.select %2, %c1_i32, %c16_i32 : i32
    %4 = vector.broadcast %3 : i32 to vector<32x128xi32>
    %5 = arith.remsi %1, %4 : vector<32x128xi32>
    %c0_i32_1 = arith.constant 0 : i32
    %6 = vector.broadcast %c0_i32_1 : i32 to vector<32x128xi32>
    %7 = arith.cmpi ne, %5, %6 : vector<32x128xi32>
    %c0_i32_2 = arith.constant 0 : i32
    %8 = vector.broadcast %c0_i32_2 : i32 to vector<32x128xi32>
    %9 = arith.cmpi slt, %5, %8 : vector<32x128xi32>
    %c0_i32_3 = arith.constant 0 : i32
    %10 = arith.cmpi slt, %3, %c0_i32_3 : i32
    %11 = vector.broadcast %10 : i1 to vector<32x128xi1>
    %12 = vector.broadcast %11 : vector<32x128xi1> to vector<32x128xi1>
    %13 = arith.xori %9, %12 : vector<32x128xi1>
    %14 = arith.andi %13, %7 : vector<32x128xi1>
    %15 = vector.broadcast %3 : i32 to vector<32x128xi32>
    %16 = arith.addi %5, %15 : vector<32x128xi32>
    %17 = arith.select %14, %16, %5 : vector<32x128xi1>, vector<32x128xi32>
    %c0_i32_4 = arith.constant 0 : i32
    %18 = vector.broadcast %c0_i32_4 : i32 to vector<32x128xi32>
    %19 = arith.cmpi eq, %17, %18 : vector<32x128xi32>
    %c15_i32 = arith.constant 15 : i32
    %20 = vector.broadcast %c15_i32 : i32 to vector<32x128xi32>
    %21 = arith.cmpi eq, %17, %20 : vector<32x128xi32>
    %c1_i32_5 = arith.constant 1 : i32
    %22 = tpu.dynamic_rotate %0 by %c1_i32_5 dim 0 : vector<32x128xf32>, i32 -> vector<32x128xf32>
    %cst = arith.constant 0.000000e+00 : f32
    %23 = vector.broadcast %cst : f32 to vector<32x128xf32>
    %24 = arith.select %19, %23, %22 : vector<32x128xi1>, vector<32x128xf32>
    %c31_i32 = arith.constant 31 : i32
    %25 = tpu.dynamic_rotate %0 by %c31_i32 dim 0 : vector<32x128xf32>, i32 -> vector<32x128xf32>
    %cst_6 = arith.constant 0.000000e+00 : f32
    %26 = vector.broadcast %cst_6 : f32 to vector<32x128xf32>
    %27 = arith.select %21, %26, %25 : vector<32x128xi1>, vector<32x128xf32>
    %28 = tpu.concatenate %24, %0, %27 in 1 : vector<32x128xf32>, vector<32x128xf32>, vector<32x128xf32> -> vector<32x384xf32>
    %c0_7 = arith.constant 0 : index
    %c0_8 = arith.constant 0 : index
    %29 = vector.load %arg2[%c0_7, %c0_8] : memref<384x128xf32, #tpu.memory_space<vmem>>, vector<384x128xf32>
    %cst_9 = arith.constant dense<0.000000e+00> : vector<32x128xf32>
    %30 = tpu.matmul %28, %29, %cst_9 {dimension_numbers = #tpu.dot_dimension_numbers<[1], [0], [0], [1], [0, 0, 1, 1], [], []>} : vector<32x384xf32>, vector<384x128xf32>, vector<32x128xf32> -> vector<32x128xf32>
    %c0_10 = arith.constant 0 : index
    %c0_11 = arith.constant 0 : index
    %31 = vector.load %arg3[%c0_10, %c0_11] : memref<1x128xf32, #tpu.memory_space<vmem>>, vector<1x128xf32>
    %32 = vector.broadcast %31 : vector<1x128xf32> to vector<32x128xf32>
    %33 = arith.addf %30, %32 : vector<32x128xf32>
    %cst_12 = arith.constant 0.000000e+00 : f32
    %34 = vector.broadcast %cst_12 : f32 to vector<32x128xf32>
    %35 = arith.maximumf %33, %34 : vector<32x128xf32>
    %c1_i32_13 = arith.constant 1 : i32
    %36 = tpu.dynamic_rotate %35 by %c1_i32_13 dim 0 : vector<32x128xf32>, i32 -> vector<32x128xf32>
    %cst_14 = arith.constant 0.000000e+00 : f32
    %37 = vector.broadcast %cst_14 : f32 to vector<32x128xf32>
    %38 = arith.select %19, %37, %36 : vector<32x128xi1>, vector<32x128xf32>
    %c31_i32_15 = arith.constant 31 : i32
    %39 = tpu.dynamic_rotate %35 by %c31_i32_15 dim 0 : vector<32x128xf32>, i32 -> vector<32x128xf32>
    %cst_16 = arith.constant 0.000000e+00 : f32
    %40 = vector.broadcast %cst_16 : f32 to vector<32x128xf32>
    %41 = arith.select %21, %40, %39 : vector<32x128xi1>, vector<32x128xf32>
    %42 = tpu.concatenate %38, %35, %41 in 1 : vector<32x128xf32>, vector<32x128xf32>, vector<32x128xf32> -> vector<32x384xf32>
    %c0_17 = arith.constant 0 : index
    %c0_18 = arith.constant 0 : index
    %43 = vector.load %arg4[%c0_17, %c0_18] : memref<384x128xf32, #tpu.memory_space<vmem>>, vector<384x128xf32>
    %cst_19 = arith.constant dense<0.000000e+00> : vector<32x128xf32>
    %44 = tpu.matmul %42, %43, %cst_19 {dimension_numbers = #tpu.dot_dimension_numbers<[1], [0], [0], [1], [0, 0, 1, 1], [], []>} : vector<32x384xf32>, vector<384x128xf32>, vector<32x128xf32> -> vector<32x128xf32>
    %c0_20 = arith.constant 0 : index
    %c0_21 = arith.constant 0 : index
    %45 = vector.load %arg5[%c0_20, %c0_21] : memref<1x128xf32, #tpu.memory_space<vmem>>, vector<1x128xf32>
    %46 = vector.broadcast %45 : vector<1x128xf32> to vector<32x128xf32>
    %47 = arith.addf %44, %46 : vector<32x128xf32>
    %48 = arith.addf %0, %47 : vector<32x128xf32>
    %cst_22 = arith.constant 0.000000e+00 : f32
    %49 = vector.broadcast %cst_22 : f32 to vector<32x128xf32>
    %50 = arith.maximumf %48, %49 : vector<32x128xf32>
    %c0_23 = arith.constant 0 : index
    %c0_24 = arith.constant 0 : index
    %51 = vector.load %arg6[%c0_23, %c0_24] : memref<32x128xf32, #tpu.memory_space<vmem>>, vector<32x128xf32>
    tpu.vector_store %arg6[%c0_23, %c0_24], %50 {strides = array<i32>} : memref<32x128xf32, #tpu.memory_space<vmem>>, vector<32x128xf32>,
    return
  }
  func.func @transform_0(%arg0: i32) -> (i32, i32) {
    %c0_i32 = arith.constant 0 : i32
    %c0_i32_0 = arith.constant 0 : i32
    return %arg0, %c0_i32 : i32, i32
  }
  func.func @transform_1(%arg0: i32) -> (i32, i32) {
    %c0_i32 = arith.constant 0 : i32
    %c0_i32_0 = arith.constant 0 : i32
    %c0_i32_1 = arith.constant 0 : i32
    return %c0_i32, %c0_i32_0 : i32, i32
  }
  func.func @transform_2(%arg0: i32) -> (i32, i32) {
    %c0_i32 = arith.constant 0 : i32
    %c0_i32_0 = arith.constant 0 : i32
    %c0_i32_1 = arith.constant 0 : i32
    return %c0_i32, %c0_i32_0 : i32, i32
  }
  func.func @transform_3(%arg0: i32) -> (i32, i32) {
    %c0_i32 = arith.constant 0 : i32
    %c0_i32_0 = arith.constant 0 : i32
    %c0_i32_1 = arith.constant 0 : i32
    return %c0_i32, %c0_i32_0 : i32, i32
  }
  func.func @transform_4(%arg0: i32) -> (i32, i32) {
    %c0_i32 = arith.constant 0 : i32
    %c0_i32_0 = arith.constant 0 : i32
    %c0_i32_1 = arith.constant 0 : i32
    return %c0_i32, %c0_i32_0 : i32, i32
  }
  func.func @transform_5(%arg0: i32) -> (i32, i32) {
    %c0_i32 = arith.constant 0 : i32
    %c0_i32_0 = arith.constant 0 : i32
    return %arg0, %c0_i32 : i32, i32
  }
}

</mosaic_0001>

<llo_original>
// kernel: tpu_custom_call.1
$region0: #{tpu_custom_call.1}
  #allocation0 [shape = 'u32[]', space=smem, size = 0x4, offset = 0x4, fixed_abs, tag = 'smem constant byte address 0x4 - core index']
  #allocation1 [shape = 'u32[72,128]{1,0:T(1,128)}', space=vmem, size = 0x9000, scoped, tag = 'internal scratch']
  %s0 = inlined_call_operand.hbm [shape: f32[32,128], index: 0, kind: input, shape index: {}]
  %s1 = inlined_call_operand.hbm [shape: f32[384,128], index: 1, kind: input, shape index: {}]
  %s2 = inlined_call_operand.vmem [shape: f32[1,128], index: 2, kind: input, shape index: {}]
  %s3 = inlined_call_operand.hbm [shape: f32[384,128], index: 3, kind: input, shape index: {}]
  %s4 = inlined_call_operand.vmem [shape: f32[1,128], index: 4, kind: input, shape index: {}]
  %s5 = inlined_call_operand.hbm [shape: f32[32,128], index: 5, kind: output, shape index: {}]
  %s6 = sld [smem:[#allocation0]]
  $region42: #{tpu_custom_call.1} parent=0
    _
  %s8 = ssub.s32 1, %s6
  %s9 = scalar_select 0, %s8, %s6
  $region1: #{tpu_custom_call.1} parent=0
    #allocation2 [shape = 'u8[16384]{0}', space=vmem, size = 0x4000, scoped, tag = 'input window, operand 0, single buffered']
    #allocation3 [shape = 's32[1]{0}', space=sflag, size = 0x4, scoped, tag = 'scoped memory for tpu_custom_call.1']
    #allocation4 [shape = 's32[1]{0}', space=sflag, size = 0x4, scoped, tag = 'scoped memory for tpu_custom_call.1']
    #allocation5 [shape = 'u8[196608]{0}', space=vmem, size = 0x30000, scoped, tag = 'input window, operand 1, single buffered']
    #allocation6 [shape = 's32[1]{0}', space=sflag, size = 0x4, scoped, tag = 'scoped memory for tpu_custom_call.1']
    #allocation7 [shape = 'u8[196608]{0}', space=vmem, size = 0x30000, scoped, tag = 'input window, operand 3, single buffered']
    #allocation8 [shape = 'u8[16384]{0}', space=vmem, size = 0x4000, scoped, tag = 'output window, operand 0, single buffered']
    %10 = vsyncpa [#allocation3], 0
    %11 = vsyncpa [#allocation6], 0
    %12 = vsyncpa [#allocation4], 0
    // Predicated region
    $region2: #{tpu_custom_call.1} parent=1 // pred_check
      _
    $region3: #{tpu_custom_call.1} parent=1 // pred_check_branch
      %14 = sbr.rel (0) target = $region5
    $region4: #{tpu_custom_call.1} parent=1 // pred_region
      %16 = vsyncadd [#allocation3], 0
      %s17 = sshll.u32 %s0, 4
      %s18 = int_to_ptr.hbm [resolvable:$true] %s17
      %s19 = sshll.u32 [#allocation2], 4
      %s20 = int_to_ptr.vmem [resolvable:$true] %s19
      %25 = dma.hbm_to_vmem [thread:$0]  %s18, 512, %s20, [#allocation3], 128, 128, 8
    $region5: #{tpu_custom_call.1} parent=1 // pred_fallthru
      _
    // Predicated region
    $region6: #{tpu_custom_call.1} parent=1 // pred_check
      _
    $region7: #{tpu_custom_call.1} parent=1 // pred_check_branch
      %27 = sbr.rel (0) target = $region9
    $region8: #{tpu_custom_call.1} parent=1 // pred_region
      %29 = vsyncadd [#allocation6], 0
      %s30 = sshll.u32 %s1, 4
      %s31 = int_to_ptr.hbm [resolvable:$true] %s30
      %s32 = sshll.u32 [#allocation5], 4
      %s33 = int_to_ptr.vmem [resolvable:$true] %s32
      %38 = dma.hbm_to_vmem [thread:$0]  %s31, 6144, %s33, [#allocation6], 128, 128, 8
    $region9: #{tpu_custom_call.1} parent=1 // pred_fallthru
      _
    // Predicated region
    $region10: #{tpu_custom_call.1} parent=1 // pred_check
      _
    $region11: #{tpu_custom_call.1} parent=1 // pred_check_branch
      %40 = sbr.rel (0) target = $region13
    $region12: #{tpu_custom_call.1} parent=1 // pred_region
      _
    $region13: #{tpu_custom_call.1} parent=1 // pred_fallthru
      _
    // Predicated region
    $region14: #{tpu_custom_call.1} parent=1 // pred_check
      _
    $region15: #{tpu_custom_call.1} parent=1 // pred_check_branch
      %42 = sbr.rel (0) target = $region17
    $region16: #{tpu_custom_call.1} parent=1 // pred_region
      %44 = vsyncadd [#allocation6], 0
      %s45 = sshll.u32 %s3, 4
      %s46 = int_to_ptr.hbm [resolvable:$true] %s45
      %s47 = sshll.u32 [#allocation7], 4
      %s48 = int_to_ptr.vmem [resolvable:$true] %s47
      %53 = dma.hbm_to_vmem [thread:$0]  %s46, 6144, %s48, [#allocation6], 128, 128, 8
    $region17: #{tpu_custom_call.1} parent=1 // pred_fallthru
      _
    // Predicated region
    $region18: #{tpu_custom_call.1} parent=1 // pred_check
      _
    $region19: #{tpu_custom_call.1} parent=1 // pred_check_branch
      %55 = sbr.rel (0) target = $region21
    $region20: #{tpu_custom_call.1} parent=1 // pred_region
      _
    $region21: #{tpu_custom_call.1} parent=1 // pred_fallthru
      _
    // Predicated region
    $region22: #{tpu_custom_call.1} parent=1 // pred_check
      _
    $region23: #{tpu_custom_call.1} parent=1 // pred_check_branch
      %57 = sbr.rel (0) target = $region25
    $region24: #{tpu_custom_call.1} parent=1 // pred_region
      %59 = dma.done [#allocation3], 512
    $region25: #{tpu_custom_call.1} parent=1 // pred_fallthru
      _
    // Predicated region
    $region26: #{tpu_custom_call.1} parent=1 // pred_check
      _
    $region27: #{tpu_custom_call.1} parent=1 // pred_check_branch
      %61 = sbr.rel (0) target = $region29
    $region28: #{tpu_custom_call.1} parent=1 // pred_region
      %63 = dma.done [#allocation6], 6144
    $region29: #{tpu_custom_call.1} parent=1 // pred_fallthru
      _
    // Predicated region
    $region30: #{tpu_custom_call.1} parent=1 // pred_check
      _
    $region31: #{tpu_custom_call.1} parent=1 // pred_check_branch
      %65 = sbr.rel (0) target = $region33
    $region32: #{tpu_custom_call.1} parent=1 // pred_region
      %67 = dma.done [#allocation6], 6144
    $region33: #{tpu_custom_call.1} parent=1 // pred_fallthru
      _
    %v68 = vld [vmem:[#allocation2] sm:$0xff]
    %v69 = vld [vmem:[#allocation2 + $0x8] sm:$0xff]
    %v70 = vld [vmem:[#allocation2 + $0x10] sm:$0xff]
    %v71 = vld [vmem:[#allocation2 + $0x18] sm:$0xff]
    %v72 = vlaneseq
    %v73 = vshrl.u32 %v72, 7
    %v74 = vadd.s32 %v73, 8
    %v75 = vadd.s32 %v73, 16
    %v76 = vadd.s32 %v73, 24
    %vm77 = vcmp.lt.s32.totalorder %v73, 0
    %v78 = vsub.s32 0, %v73
    %v79 = vsel %vm77, %v78, %v73
    %v80 = vshrl.u32 %v79, 4
    %v81 = vand.u32 %v79, 15
    %v82 = vsub.s32 0, %v81
    %v83 = vsel %vm77, %v82, %v81
    %vm84 = vcmp.lt.s32.totalorder %v74, 0
    %v85 = vsub.s32 0, %v74
    %v86 = vsel %vm84, %v85, %v74
    %v87 = vshrl.u32 %v86, 4
    %v88 = vand.u32 %v86, 15
    %v89 = vsub.s32 0, %v88
    %v90 = vsel %vm84, %v89, %v88
    %vm91 = vcmp.lt.s32.totalorder %v75, 0
    %v92 = vsub.s32 0, %v75
    %v93 = vsel %vm91, %v92, %v75
    %v94 = vshrl.u32 %v93, 4
    %v95 = vand.u32 %v93, 15
    %v96 = vsub.s32 0, %v95
    %v97 = vsel %vm91, %v96, %v95
    %vm98 = vcmp.lt.s32.totalorder %v76, 0
    %v99 = vsub.s32 0, %v76
    %v100 = vsel %vm98, %v99, %v76
    %v101 = vshrl.u32 %v100, 4
    %v102 = vand.u32 %v100, 15
    %v103 = vsub.s32 0, %v102
    %v104 = vsel %vm98, %v103, %v102
    %vm105 = vcmp.ne.s32.totalorder %v83, 0
    %vm106 = vcmp.ne.s32.totalorder %v90, 0
    %vm107 = vcmp.ne.s32.totalorder %v97, 0
    %vm108 = vcmp.ne.s32.totalorder %v104, 0
    %vm109 = vcmp.lt.s32.totalorder %v83, 0
    %vm110 = vcmp.lt.s32.totalorder %v90, 0
    %vm111 = vcmp.lt.s32.totalorder %v97, 0
    %vm112 = vcmp.lt.s32.totalorder %v104, 0
    %vm113 = vmand %vm109, %vm105
    %vm114 = vmand %vm110, %vm106
    %vm115 = vmand %vm111, %vm107
    %vm116 = vmand %vm112, %vm108
    %v117 = vadd.s32 %v83, 16
    %v118 = vadd.s32 %v90, 16
    %v119 = vadd.s32 %v97, 16
    %v120 = vadd.s32 %v104, 16
    %v121 = vsel %vm113, %v117, %v83
    %v122 = vsel %vm114, %v118, %v90
    %v123 = vsel %vm115, %v119, %v97
    %v124 = vsel %vm116, %v120, %v104
    %vm125 = vcmp.eq.s32.totalorder %v121, 0
    %vm126 = vcmp.eq.s32.totalorder %v122, 0
    %vm127 = vcmp.eq.s32.totalorder %v123, 0
    %vm128 = vcmp.eq.s32.totalorder %v124, 0
    %vm129 = vcmp.eq.s32.totalorder %v121, 15
    %vm130 = vcmp.eq.s32.totalorder %v122, 15
    %vm131 = vcmp.eq.s32.totalorder %v123, 15
    %vm132 = vcmp.eq.s32.totalorder %v124, 15
    %v133 = vrot.slane %v68, 7
    %v134 = vrot.slane %v69, 7
    %v135 = vrot.slane %v70, 7
    %v136 = vrot.slane %v71, 7
    %vm137 = vcmp.lt.s32.totalorder %v73, 1
    %v138 = vsel %vm137, %v135, %v136
    %v139 = vsel %vm137, %v134, %v135
    %v140 = vsel %vm137, %v133, %v134
    %v141 = vsel %vm137, %v136, %v133
    %v142 = vsel %vm125, 0.0, %v141
    %v143 = vsel %vm126, 0.0, %v140
    %v144 = vsel %vm127, 0.0, %v139
    %v145 = vsel %vm128, 0.0, %v138
    %v146 = vrot.slane %v68, 1
    %v147 = vrot.slane %v69, 1
    %v148 = vrot.slane %v70, 1
    %v149 = vrot.slane %v71, 1
    %vm150 = vcmp.lt.s32.totalorder %v73, 7
    %v151 = vsel %vm150, %v148, %v149
    %v152 = vsel %vm150, %v147, %v148
    %v153 = vsel %vm150, %v146, %v147
    %v154 = vsel %vm150, %v149, %v146
    %v155 = vsel %vm129, 0.0, %v153
    %v156 = vsel %vm130, 0.0, %v152
    %v157 = vsel %vm131, 0.0, %v151
    %v158 = vsel %vm132, 0.0, %v154
    %v159 = vld [vmem:[#allocation5] sm:$0xff]
    %v160 = vld [vmem:[#allocation5 + $0x8] sm:$0xff]
    %v161 = vld [vmem:[#allocation5 + $0x10] sm:$0xff]
    %v162 = vld [vmem:[#allocation5 + $0x18] sm:$0xff]
    %v163 = vld [vmem:[#allocation5 + $0x20] sm:$0xff]
    %v164 = vld [vmem:[#allocation5 + $0x28] sm:$0xff]
    %v165 = vld [vmem:[#allocation5 + $0x30] sm:$0xff]
    %v166 = vld [vmem:[#allocation5 + $0x38] sm:$0xff]
    %v167 = vld [vmem:[#allocation5 + $0x40] sm:$0xff]
    %v168 = vld [vmem:[#allocation5 + $0x48] sm:$0xff]
    %v169 = vld [vmem:[#allocation5 + $0x50] sm:$0xff]
    %v170 = vld [vmem:[#allocation5 + $0x58] sm:$0xff]
    %v171 = vld [vmem:[#allocation5 + $0x60] sm:$0xff]
    %v172 = vld [vmem:[#allocation5 + $0x68] sm:$0xff]
    %v173 = vld [vmem:[#allocation5 + $0x70] sm:$0xff]
    %v174 = vld [vmem:[#allocation5 + $0x78] sm:$0xff]
    %v175 = vld [vmem:[#allocation5 + $0x80] sm:$0xff]
    %v176 = vld [vmem:[#allocation5 + $0x88] sm:$0xff]
    %v177 = vld [vmem:[#allocation5 + $0x90] sm:$0xff]
    %v178 = vld [vmem:[#allocation5 + $0x98] sm:$0xff]
    %v179 = vld [vmem:[#allocation5 + $0xa0] sm:$0xff]
    %v180 = vld [vmem:[#allocation5 + $0xa8] sm:$0xff]
    %v181 = vld [vmem:[#allocation5 + $0xb0] sm:$0xff]
    %v182 = vld [vmem:[#allocation5 + $0xb8] sm:$0xff]
    %v183 = vld [vmem:[#allocation5 + $0xc0] sm:$0xff]
    %v184 = vld [vmem:[#allocation5 + $0xc8] sm:$0xff]
    %v185 = vld [vmem:[#allocation5 + $0xd0] sm:$0xff]
    %v186 = vld [vmem:[#allocation5 + $0xd8] sm:$0xff]
    %v187 = vld [vmem:[#allocation5 + $0xe0] sm:$0xff]
    %v188 = vld [vmem:[#allocation5 + $0xe8] sm:$0xff]
    %v189 = vld [vmem:[#allocation5 + $0xf0] sm:$0xff]
    %v190 = vld [vmem:[#allocation5 + $0xf8] sm:$0xff]
    %v191 = vld [vmem:[#allocation5 + $0x100] sm:$0xff]
    %v192 = vld [vmem:[#allocation5 + $0x108] sm:$0xff]
    %v193 = vld [vmem:[#allocation5 + $0x110] sm:$0xff]
    %v194 = vld [vmem:[#allocation5 + $0x118] sm:$0xff]
    %v195 = vld [vmem:[#allocation5 + $0x120] sm:$0xff]
    %v196 = vld [vmem:[#allocation5 + $0x128] sm:$0xff]
    %v197 = vld [vmem:[#allocation5 + $0x130] sm:$0xff]
    %v198 = vld [vmem:[#allocation5 + $0x138] sm:$0xff]
    %v199 = vld [vmem:[#allocation5 + $0x140] sm:$0xff]
    %v200 = vld [vmem:[#allocation5 + $0x148] sm:$0xff]
    %v201 = vld [vmem:[#allocation5 + $0x150] sm:$0xff]
    %v202 = vld [vmem:[#allocation5 + $0x158] sm:$0xff]
    %v203 = vld [vmem:[#allocation5 + $0x160] sm:$0xff]
    %v204 = vld [vmem:[#allocation5 + $0x168] sm:$0xff]
    %v205 = vld [vmem:[#allocation5 + $0x170] sm:$0xff]
    %v206 = vld [vmem:[#allocation5 + $0x178] sm:$0xff]
    %v207 = vld [vmem:[%s2] sm:$0x1]
    %v209 = vperm.slane %v207, 0
    %211 = vmatpush.msra.mxu0 %v174
    %212 = vmatpush.msra.mxu0 %v173
    %213 = vmatpush.msra.mxu0 %v172
    %214 = vmatpush.msra.mxu0 %v171
    %215 = vmatpush.msra.mxu0 %v170
    %216 = vmatpush.msra.mxu0 %v169
    %217 = vmatpush.msra.mxu0 %v168
    %218 = vmatpush.msra.mxu0 %v167
    %219 = vmatpush.msra.mxu0 %v166
    %220 = vmatpush.msra.mxu0 %v165
    %221 = vmatpush.msra.mxu0 %v164
    %222 = vmatpush.msra.mxu0 %v163
    %223 = vmatpush.msra.mxu0 %v162
    %224 = vmatpush.msra.mxu0 %v161
    %225 = vmatpush.msra.mxu0 %v160
    %226 = vmatpush.msra.mxu0 %v159
    %227 = vmatmul.f32.gmra.mxu0 %v142
    %v228 = vpop.f32.mrf.mxu0
    %v229 = vadd.f32 %v209, %v228
    %230 = vmatmul.f32.gmra.mxu0 %v143
    %v231 = vpop.f32.mrf.mxu0
    %v232 = vadd.f32 %v209, %v231
    %233 = vmatmul.f32.gmra.mxu0 %v144
    %v234 = vpop.f32.mrf.mxu0
    %v235 = vadd.f32 %v209, %v234
    %236 = vmatmul.f32.gmra.mxu0 %v145
    %v237 = vpop.f32.mrf.mxu0
    %v238 = vadd.f32 %v209, %v237
    %239 = vdwg.mxu0
    %240 = vmatpush.msra.mxu0 %v190
    %241 = vmatpush.msra.mxu0 %v189
    %242 = vmatpush.msra.mxu0 %v188
    %243 = vmatpush.msra.mxu0 %v187
    %244 = vmatpush.msra.mxu0 %v186
    %245 = vmatpush.msra.mxu0 %v185
    %246 = vmatpush.msra.mxu0 %v184
    %247 = vmatpush.msra.mxu0 %v183
    %248 = vmatpush.msra.mxu0 %v182
    %249 = vmatpush.msra.mxu0 %v181
    %250 = vmatpush.msra.mxu0 %v180
    %251 = vmatpush.msra.mxu0 %v179
    %252 = vmatpush.msra.mxu0 %v178
    %253 = vmatpush.msra.mxu0 %v177
    %254 = vmatpush.msra.mxu0 %v176
    %255 = vmatpush.msra.mxu0 %v175
    %256 = vmatmul.f32.gmra.mxu0 %v68
    %v257 = vpop.f32.mrf.mxu0
    %v258 = vadd.f32 %v229, %v257
    %259 = vmatmul.f32.gmra.mxu0 %v69
    %v260 = vpop.f32.mrf.mxu0
    %v261 = vadd.f32 %v232, %v260
    %262 = vmatmul.f32.gmra.mxu0 %v70
    %v263 = vpop.f32.mrf.mxu0
    %v264 = vadd.f32 %v235, %v263
    %265 = vmatmul.f32.gmra.mxu0 %v71
    %v266 = vpop.f32.mrf.mxu0
    %v267 = vadd.f32 %v238, %v266
    %268 = vdwg.mxu0
    %269 = vmatpush.msra.mxu0 %v206
    %270 = vmatpush.msra.mxu0 %v205
    %271 = vmatpush.msra.mxu0 %v204
    %272 = vmatpush.msra.mxu0 %v203
    %273 = vmatpush.msra.mxu0 %v202
    %274 = vmatpush.msra.mxu0 %v201
    %275 = vmatpush.msra.mxu0 %v200
    %276 = vmatpush.msra.mxu0 %v199
    %277 = vmatpush.msra.mxu0 %v198
    %278 = vmatpush.msra.mxu0 %v197
    %279 = vmatpush.msra.mxu0 %v196
    %280 = vmatpush.msra.mxu0 %v195
    %281 = vmatpush.msra.mxu0 %v194
    %282 = vmatpush.msra.mxu0 %v193
    %283 = vmatpush.msra.mxu0 %v192
    %284 = vmatpush.msra.mxu0 %v191
    %285 = vmatmul.f32.gmra.mxu0 %v155
    %v286 = vpop.f32.mrf.mxu0
    %v287 = vadd.f32 %v258, %v286
    %288 = vmatmul.f32.gmra.mxu0 %v156
    %v289 = vpop.f32.mrf.mxu0
    %v290 = vadd.f32 %v261, %v289
    %291 = vmatmul.f32.gmra.mxu0 %v157
    %v292 = vpop.f32.mrf.mxu0
    %v293 = vadd.f32 %v264, %v292
    %294 = vmatmul.f32.gmra.mxu0 %v158
    %v295 = vpop.f32.mrf.mxu0
    %v296 = vadd.f32 %v267, %v295
    %297 = vdwg.mxu0
    %v298 = vmax.f32 %v287, 0.0
    %v299 = vmax.f32 %v290, 0.0
    %v300 = vmax.f32 %v293, 0.0
    %v301 = vmax.f32 %v296, 0.0
    %v302 = vrot.slane %v298, 7
    %v303 = vrot.slane %v299, 7
    %v304 = vrot.slane %v300, 7
    %v305 = vrot.slane %v301, 7
    %v306 = vsel %vm137, %v304, %v305
    %v307 = vsel %vm137, %v303, %v304
    %v308 = vsel %vm137, %v302, %v303
    %v309 = vsel %vm137, %v305, %v302
    %v310 = vsel %vm125, 0.0, %v309
    %v311 = vsel %vm126, 0.0, %v308
    %v312 = vsel %vm127, 0.0, %v307
    %v313 = vsel %vm128, 0.0, %v306
    %v314 = vrot.slane %v298, 1
    %v315 = vrot.slane %v299, 1
    %v316 = vrot.slane %v300, 1
    %v317 = vrot.slane %v301, 1
    %v318 = vsel %vm150, %v316, %v317
    %v319 = vsel %vm150, %v315, %v316
    %v320 = vsel %vm150, %v314, %v315
    %v321 = vsel %vm150, %v317, %v314
    %v322 = vsel %vm129, 0.0, %v320
    %v323 = vsel %vm130, 0.0, %v319
    %v324 = vsel %vm131, 0.0, %v318
    %v325 = vsel %vm132, 0.0, %v321
    %v326 = vld [vmem:[#allocation7] sm:$0xff]
    %v327 = vld [vmem:[#allocation7 + $0x8] sm:$0xff]
    %v328 = vld [vmem:[#allocation7 + $0x10] sm:$0xff]
    %v329 = vld [vmem:[#allocation7 + $0x18] sm:$0xff]
    %v330 = vld [vmem:[#allocation7 + $0x20] sm:$0xff]
    %v331 = vld [vmem:[#allocation7 + $0x28] sm:$0xff]
    %v332 = vld [vmem:[#allocation7 + $0x30] sm:$0xff]
    %v333 = vld [vmem:[#allocation7 + $0x38] sm:$0xff]
    %v334 = vld [vmem:[#allocation7 + $0x40] sm:$0xff]
    %v335 = vld [vmem:[#allocation7 + $0x48] sm:$0xff]
    %v336 = vld [vmem:[#allocation7 + $0x50] sm:$0xff]
    %v337 = vld [vmem:[#allocation7 + $0x58] sm:$0xff]
    %v338 = vld [vmem:[#allocation7 + $0x60] sm:$0xff]
    %v339 = vld [vmem:[#allocation7 + $0x68] sm:$0xff]
    %v340 = vld [vmem:[#allocation7 + $0x70] sm:$0xff]
    %v341 = vld [vmem:[#allocation7 + $0x78] sm:$0xff]
    %v342 = vld [vmem:[#allocation7 + $0x80] sm:$0xff]
    %v343 = vld [vmem:[#allocation7 + $0x88] sm:$0xff]
    %v344 = vld [vmem:[#allocation7 + $0x90] sm:$0xff]
    %v345 = vld [vmem:[#allocation7 + $0x98] sm:$0xff]
    %v346 = vld [vmem:[#allocation7 + $0xa0] sm:$0xff]
    %v347 = vld [vmem:[#allocation7 + $0xa8] sm:$0xff]
    %v348 = vld [vmem:[#allocation7 + $0xb0] sm:$0xff]
    %v349 = vld [vmem:[#allocation7 + $0xb8] sm:$0xff]
    %v350 = vld [vmem:[#allocation7 + $0xc0] sm:$0xff]
    %v351 = vld [vmem:[#allocation7 + $0xc8] sm:$0xff]
    %v352 = vld [vmem:[#allocation7 + $0xd0] sm:$0xff]
    %v353 = vld [vmem:[#allocation7 + $0xd8] sm:$0xff]
    %v354 = vld [vmem:[#allocation7 + $0xe0] sm:$0xff]
    %v355 = vld [vmem:[#allocation7 + $0xe8] sm:$0xff]
    %v356 = vld [vmem:[#allocation7 + $0xf0] sm:$0xff]
    %v357 = vld [vmem:[#allocation7 + $0xf8] sm:$0xff]
    %v358 = vld [vmem:[#allocation7 + $0x100] sm:$0xff]
    %v359 = vld [vmem:[#allocation7 + $0x108] sm:$0xff]
    %v360 = vld [vmem:[#allocation7 + $0x110] sm:$0xff]
    %v361 = vld [vmem:[#allocation7 + $0x118] sm:$0xff]
    %v362 = vld [vmem:[#allocation7 + $0x120] sm:$0xff]
    %v363 = vld [vmem:[#allocation7 + $0x128] sm:$0xff]
    %v364 = vld [vmem:[#allocation7 + $0x130] sm:$0xff]
    %v365 = vld [vmem:[#allocation7 + $0x138] sm:$0xff]
    %v366 = vld [vmem:[#allocation7 + $0x140] sm:$0xff]
    %v367 = vld [vmem:[#allocation7 + $0x148] sm:$0xff]
    %v368 = vld [vmem:[#allocation7 + $0x150] sm:$0xff]
    %v369 = vld [vmem:[#allocation7 + $0x158] sm:$0xff]
    %v370 = vld [vmem:[#allocation7 + $0x160] sm:$0xff]
    %v371 = vld [vmem:[#allocation7 + $0x168] sm:$0xff]
    %v372 = vld [vmem:[#allocation7 + $0x170] sm:$0xff]
    %v373 = vld [vmem:[#allocation7 + $0x178] sm:$0xff]
    %v374 = vld [vmem:[%s4] sm:$0x1]
    %v376 = vperm.slane %v374, 0
    %378 = vmatpush.msra.mxu0 %v341
    %379 = vmatpush.msra.mxu0 %v340
    %380 = vmatpush.msra.mxu0 %v339
    %381 = vmatpush.msra.mxu0 %v338
    %382 = vmatpush.msra.mxu0 %v337
    %383 = vmatpush.msra.mxu0 %v336
    %384 = vmatpush.msra.mxu0 %v335
    %385 = vmatpush.msra.mxu0 %v334
    %386 = vmatpush.msra.mxu0 %v333
    %387 = vmatpush.msra.mxu0 %v332
    %388 = vmatpush.msra.mxu0 %v331
    %389 = vmatpush.msra.mxu0 %v330
    %390 = vmatpush.msra.mxu0 %v329
    %391 = vmatpush.msra.mxu0 %v328
    %392 = vmatpush.msra.mxu0 %v327
    %393 = vmatpush.msra.mxu0 %v326
    %394 = vmatmul.f32.gmra.mxu0 %v310
    %v395 = vpop.f32.mrf.mxu0
    %v396 = vadd.f32 %v376, %v395
    %397 = vmatmul.f32.gmra.mxu0 %v311
    %v398 = vpop.f32.mrf.mxu0
    %v399 = vadd.f32 %v376, %v398
    %400 = vmatmul.f32.gmra.mxu0 %v312
    %v401 = vpop.f32.mrf.mxu0
    %v402 = vadd.f32 %v376, %v401
    %403 = vmatmul.f32.gmra.mxu0 %v313
    %v404 = vpop.f32.mrf.mxu0
    %v405 = vadd.f32 %v376, %v404
    %406 = vdwg.mxu0
    %407 = vmatpush.msra.mxu0 %v357
    %408 = vmatpush.msra.mxu0 %v356
    %409 = vmatpush.msra.mxu0 %v355
    %410 = vmatpush.msra.mxu0 %v354
    %411 = vmatpush.msra.mxu0 %v353
    %412 = vmatpush.msra.mxu0 %v352
    %413 = vmatpush.msra.mxu0 %v351
    %414 = vmatpush.msra.mxu0 %v350
    %415 = vmatpush.msra.mxu0 %v349
    %416 = vmatpush.msra.mxu0 %v348
    %417 = vmatpush.msra.mxu0 %v347
    %418 = vmatpush.msra.mxu0 %v346
    %419 = vmatpush.msra.mxu0 %v345
    %420 = vmatpush.msra.mxu0 %v344
    %421 = vmatpush.msra.mxu0 %v343
    %422 = vmatpush.msra.mxu0 %v342
    %423 = vmatmul.f32.gmra.mxu0 %v298
    %v424 = vpop.f32.mrf.mxu0
    %v425 = vadd.f32 %v396, %v424
    %426 = vmatmul.f32.gmra.mxu0 %v299
    %v427 = vpop.f32.mrf.mxu0
    %v428 = vadd.f32 %v399, %v427
    %429 = vmatmul.f32.gmra.mxu0 %v300
    %v430 = vpop.f32.mrf.mxu0
    %v431 = vadd.f32 %v402, %v430
    %432 = vmatmul.f32.gmra.mxu0 %v301
    %v433 = vpop.f32.mrf.mxu0
    %v434 = vadd.f32 %v405, %v433
    %435 = vdwg.mxu0
    %436 = vmatpush.msra.mxu0 %v373
    %437 = vmatpush.msra.mxu0 %v372
    %438 = vmatpush.msra.mxu0 %v371
    %439 = vmatpush.msra.mxu0 %v370
    %440 = vmatpush.msra.mxu0 %v369
    %441 = vmatpush.msra.mxu0 %v368
    %442 = vmatpush.msra.mxu0 %v367
    %443 = vmatpush.msra.mxu0 %v366
    %444 = vmatpush.msra.mxu0 %v365
    %445 = vmatpush.msra.mxu0 %v364
    %446 = vmatpush.msra.mxu0 %v363
    %447 = vmatpush.msra.mxu0 %v362
    %448 = vmatpush.msra.mxu0 %v361
    %449 = vmatpush.msra.mxu0 %v360
    %450 = vmatpush.msra.mxu0 %v359
    %451 = vmatpush.msra.mxu0 %v358
    %452 = vmatmul.f32.gmra.mxu0 %v322
    %v453 = vpop.f32.mrf.mxu0
    %v454 = vadd.f32 %v425, %v453
    %455 = vmatmul.f32.gmra.mxu0 %v323
    %v456 = vpop.f32.mrf.mxu0
    %v457 = vadd.f32 %v428, %v456
    %458 = vmatmul.f32.gmra.mxu0 %v324
    %v459 = vpop.f32.mrf.mxu0
    %v460 = vadd.f32 %v431, %v459
    %461 = vmatmul.f32.gmra.mxu0 %v325
    %v462 = vpop.f32.mrf.mxu0
    %v463 = vadd.f32 %v434, %v462
    %464 = vdwg.mxu0
    %v465 = vadd.f32 %v68, %v454
    %v466 = vadd.f32 %v69, %v457
    %v467 = vadd.f32 %v70, %v460
    %v468 = vadd.f32 %v71, %v463
    %v469 = vmax.f32 %v465, 0.0
    %v470 = vmax.f32 %v466, 0.0
    %v471 = vmax.f32 %v467, 0.0
    %v472 = vmax.f32 %v468, 0.0
    %473 = vst [vmem:[#allocation8] sm:$0xff] %v469
    %474 = vst [vmem:[#allocation8 + $0x8] sm:$0xff] %v470
    %475 = vst [vmem:[#allocation8 + $0x10] sm:$0xff] %v471
    %476 = vst [vmem:[#allocation8 + $0x18] sm:$0xff] %v472
    // Predicated region
    $region34: #{tpu_custom_call.1} parent=1 // pred_check
      _
    $region35: #{tpu_custom_call.1} parent=1 // pred_check_branch
      %478 = sbr.rel (0) target = $region37
    $region36: #{tpu_custom_call.1} parent=1 // pred_region
      %480 = vsyncadd [#allocation4], 0
      %s481 = sshll.u32 [#allocation8], 4
      %s482 = int_to_ptr.vmem [resolvable:$true] %s481
      %s483 = sshll.u32 %s5, 4
      %s484 = int_to_ptr.hbm [resolvable:$true] %s483
      %489 = dma.vmem_to_hbm [thread:$0]  %s482, 512, %s484, [#allocation4], 128, 128, 8
    $region37: #{tpu_custom_call.1} parent=1 // pred_fallthru
      _
    // Predicated region
    $region38: #{tpu_custom_call.1} parent=1 // pred_check
      _
    $region39: #{tpu_custom_call.1} parent=1 // pred_check_branch
      %491 = sbr.rel (0) target = $region41
    $region40: #{tpu_custom_call.1} parent=1 // pred_region
      %493 = dma.done [#allocation4], 512
    $region41: #{tpu_custom_call.1} parent=1 // pred_fallthru
      _
    %494 = vsyncpa [#allocation3], 1
    %495 = vsyncpa [#allocation6], 1
    %496 = vsyncpa [#allocation4], 1

// kernel: tpu_custom_call.1
$region0: #{tpu_custom_call.1}
  #allocation0 [shape = 'u32[]', space=smem, size = 0x4, offset = 0x4, fixed_abs, tag = 'smem constant byte address 0x4 - core index']
  #allocation1 [shape = 'u32[72,128]{1,0:T(1,128)}', space=vmem, size = 0x9000, scoped, tag = 'internal scratch']
  %s0 = inlined_call_operand.hbm [shape: f32[32,128], index: 0, kind: input, shape index: {}]
  %s1 = inlined_call_operand.hbm [shape: f32[384,128], index: 1, kind: input, shape index: {}]
  %s2 = inlined_call_operand.vmem [shape: f32[1,128], index: 2, kind: input, shape index: {}]
  %s3 = inlined_call_operand.hbm [shape: f32[384,128], index: 3, kind: input, shape index: {}]
  %s4 = inlined_call_operand.vmem [shape: f32[1,128], index: 4, kind: input, shape index: {}]
  %s5 = inlined_call_operand.hbm [shape: f32[32,128], index: 5, kind: output, shape index: {}]
  %s6 = sld [smem:[#allocation0]]
  $region42: #{tpu_custom_call.1} parent=0
    _
  %s8 = ssub.s32 1, %s6
  %s9 = scalar_select 0, %s8, %s6
  $region1: #{tpu_custom_call.1} parent=0
    #allocation2 [shape = 'u8[16384]{0}', space=vmem, size = 0x4000, scoped, tag = 'input window, operand 0, single buffered']
    #allocation3 [shape = 's32[1]{0}', space=sflag, size = 0x4, scoped, tag = 'scoped memory for tpu_custom_call.1']
    #allocation4 [shape = 's32[1]{0}', space=sflag, size = 0x4, scoped, tag = 'scoped memory for tpu_custom_call.1']
    #allocation5 [shape = 'u8[196608]{0}', space=vmem, size = 0x30000, scoped, tag = 'input window, operand 1, single buffered']
    #allocation6 [shape = 's32[1]{0}', space=sflag, size = 0x4, scoped, tag = 'scoped memory for tpu_custom_call.1']
    #allocation7 [shape = 'u8[196608]{0}', space=vmem, size = 0x30000, scoped, tag = 'input window, operand 3, single buffered']
    #allocation8 [shape = 'u8[16384]{0}', space=vmem, size = 0x4000, scoped, tag = 'output window, operand 0, single buffered']
    %10 = vsyncpa [#allocation3], 0
    %11 = vsyncpa [#allocation6], 0
    %12 = vsyncpa [#allocation4], 0
    // Predicated region
    $region2: #{tpu_custom_call.1} parent=1 // pred_check
      _
    $region3: #{tpu_custom_call.1} parent=1 // pred_check_branch
      %14 = sbr.rel (0) target = $region5
    $region4: #{tpu_custom_call.1} parent=1 // pred_region
      %16 = vsyncadd [#allocation3], 0
      %s17 = sshll.u32 %s0, 4
      %s18 = int_to_ptr.hbm [resolvable:$true] %s17
      %s19 = sshll.u32 [#allocation2], 4
      %s20 = int_to_ptr.vmem [resolvable:$true] %s19
      %25 = dma.hbm_to_vmem [thread:$0]  %s18, 512, %s20, [#allocation3], 128, 128, 8
    $region5: #{tpu_custom_call.1} parent=1 // pred_fallthru
      _
    // Predicated region
    $region6: #{tpu_custom_call.1} parent=1 // pred_check
      _
    $region7: #{tpu_custom_call.1} parent=1 // pred_check_branch
      %27 = sbr.rel (0) target = $region9
    $region8: #{tpu_custom_call.1} parent=1 // pred_region
      %29 = vsyncadd [#allocation6], 0
      %s30 = sshll.u32 %s1, 4
      %s31 = int_to_ptr.hbm [resolvable:$true] %s30
      %s32 = sshll.u32 [#allocation5], 4
      %s33 = int_to_ptr.vmem [resolvable:$true] %s32
      %38 = dma.hbm_to_vmem [thread:$0]  %s31, 6144, %s33, [#allocation6], 128, 128, 8
    $region9: #{tpu_custom_call.1} parent=1 // pred_fallthru
      _
    // Predicated region
    $region10: #{tpu_custom_call.1} parent=1 // pred_check
      _
    $region11: #{tpu_custom_call.1} parent=1 // pred_check_branch
      %40 = sbr.rel (0) target = $region13
    $region12: #{tpu_custom_call.1} parent=1 // pred_region
      _
    $region13: #{tpu_custom_call.1} parent=1 // pred_fallthru
      _
    // Predicated region
    $region14: #{tpu_custom_call.1} parent=1 // pred_check
      _
    $region15: #{tpu_custom_call.1} parent=1 // pred_check_branch
      %42 = sbr.rel (0) target = $region17
    $region16: #{tpu_custom_call.1} parent=1 // pred_region
      %44 = vsyncadd [#allocation6], 0
      %s45 = sshll.u32 %s3, 4
      %s46 = int_to_ptr.hbm [resolvable:$true] %s45
      %s47 = sshll.u32 [#allocation7], 4
      %s48 = int_to_ptr.vmem [resolvable:$true] %s47
      %53 = dma.hbm_to_vmem [thread:$0]  %s46, 6144, %s48, [#allocation6], 128, 128, 8
    $region17: #{tpu_custom_call.1} parent=1 // pred_fallthru
      _
    // Predicated region
    $region18: #{tpu_custom_call.1} parent=1 // pred_check
      _
    $region19: #{tpu_custom_call.1} parent=1 // pred_check_branch
      %55 = sbr.rel (0) target = $region21
    $region20: #{tpu_custom_call.1} parent=1 // pred_region
      _
    $region21: #{tpu_custom_call.1} parent=1 // pred_fallthru
      _
    // Predicated region
    $region22: #{tpu_custom_call.1} parent=1 // pred_check
      _
    $region23: #{tpu_custom_call.1} parent=1 // pred_check_branch
      %57 = sbr.rel (0) target = $region25
    $region24: #{tpu_custom_call.1} parent=1 // pred_region
      %59 = dma.done [#allocation3], 512
    $region25: #{tpu_custom_call.1} parent=1 // pred_fallthru
      _
    // Predicated region
    $region26: #{tpu_custom_call.1} parent=1 // pred_check
      _
    $region27: #{tpu_custom_call.1} parent=1 // pred_check_branch
      %61 = sbr.rel (0) target = $region29
    $region28: #{tpu_custom_call.1} parent=1 // pred_region
      %63 = dma.done [#allocation6], 6144
    $region29: #{tpu_custom_call.1} parent=1 // pred_fallthru
      _
    // Predicated region
    $region30: #{tpu_custom_call.1} parent=1 // pred_check
      _
    $region31: #{tpu_custom_call.1} parent=1 // pred_check_branch
      %65 = sbr.rel (0) target = $region33
    $region32: #{tpu_custom_call.1} parent=1 // pred_region
      %67 = dma.done [#allocation6], 6144
    $region33: #{tpu_custom_call.1} parent=1 // pred_fallthru
      _
    %v68 = vld [vmem:[#allocation2] sm:$0xff]
    %v69 = vld [vmem:[#allocation2 + $0x8] sm:$0xff]
    %v70 = vld [vmem:[#allocation2 + $0x10] sm:$0xff]
    %v71 = vld [vmem:[#allocation2 + $0x18] sm:$0xff]
    %v72 = vlaneseq
    %v73 = vshrl.u32 %v72, 7
    %v74 = vadd.s32 %v73, 8
    %v75 = vadd.s32 %v73, 16
    %v76 = vadd.s32 %v73, 24
    %vm77 = vcmp.lt.s32.totalorder %v73, 0
    %v78 = vsub.s32 0, %v73
    %v79 = vsel %vm77, %v78, %v73
    %v80 = vshrl.u32 %v79, 4
    %v81 = vand.u32 %v79, 15
    %v82 = vsub.s32 0, %v81
    %v83 = vsel %vm77, %v82, %v81
    %vm84 = vcmp.lt.s32.totalorder %v74, 0
    %v85 = vsub.s32 0, %v74
    %v86 = vsel %vm84, %v85, %v74
    %v87 = vshrl.u32 %v86, 4
    %v88 = vand.u32 %v86, 15
    %v89 = vsub.s32 0, %v88
    %v90 = vsel %vm84, %v89, %v88
    %vm91 = vcmp.lt.s32.totalorder %v75, 0
    %v92 = vsub.s32 0, %v75
    %v93 = vsel %vm91, %v92, %v75
    %v94 = vshrl.u32 %v93, 4
    %v95 = vand.u32 %v93, 15
    %v96 = vsub.s32 0, %v95
    %v97 = vsel %vm91, %v96, %v95
    %vm98 = vcmp.lt.s32.totalorder %v76, 0
    %v99 = vsub.s32 0, %v76
    %v100 = vsel %vm98, %v99, %v76
    %v101 = vshrl.u32 %v100, 4
    %v102 = vand.u32 %v100, 15
    %v103 = vsub.s32 0, %v102
    %v104 = vsel %vm98, %v103, %v102
    %vm105 = vcmp.ne.s32.totalorder %v83, 0
    %vm106 = vcmp.ne.s32.totalorder %v90, 0
    %vm107 = vcmp.ne.s32.totalorder %v97, 0
    %vm108 = vcmp.ne.s32.totalorder %v104, 0
    %vm109 = vcmp.lt.s32.totalorder %v83, 0
    %vm110 = vcmp.lt.s32.totalorder %v90, 0
    %vm111 = vcmp.lt.s32.totalorder %v97, 0
    %vm112 = vcmp.lt.s32.totalorder %v104, 0
    %vm113 = vmand %vm109, %vm105
    %vm114 = vmand %vm110, %vm106
    %vm115 = vmand %vm111, %vm107
    %vm116 = vmand %vm112, %vm108
    %v117 = vadd.s32 %v83, 16
    %v118 = vadd.s32 %v90, 16
    %v119 = vadd.s32 %v97, 16
    %v120 = vadd.s32 %v104, 16
    %v121 = vsel %vm113, %v117, %v83
    %v122 = vsel %vm114, %v118, %v90
    %v123 = vsel %vm115, %v119, %v97
    %v124 = vsel %vm116, %v120, %v104
    %vm125 = vcmp.eq.s32.totalorder %v121, 0
    %vm126 = vcmp.eq.s32.totalorder %v122, 0
    %vm127 = vcmp.eq.s32.totalorder %v123, 0
    %vm128 = vcmp.eq.s32.totalorder %v124, 0
    %vm129 = vcmp.eq.s32.totalorder %v121, 15
    %vm130 = vcmp.eq.s32.totalorder %v122, 15
    %vm131 = vcmp.eq.s32.totalorder %v123, 15
    %vm132 = vcmp.eq.s32.totalorder %v124, 15
    %v133 = vrot.slane %v68, 7
    %v134 = vrot.slane %v69, 7
    %v135 = vrot.slane %v70, 7
    %v136 = vrot.slane %v71, 7
    %vm137 = vcmp.lt.s32.totalorder %v73, 1
    %v138 = vsel %vm137, %v135, %v136
    %v139 = vsel %vm137, %v134, %v135
    %v140 = vsel %vm137, %v133, %v134
    %v141 = vsel %vm137, %v136, %v133
    %v142 = vsel %vm125, 0.0, %v141
    %v143 = vsel %vm126, 0.0, %v140
    %v144 = vsel %vm127, 0.0, %v139
    %v145 = vsel %vm128, 0.0, %v138
    %v146 = vrot.slane %v68, 1
    %v147 = vrot.slane %v69, 1
    %v148 = vrot.slane %v70, 1
    %v149 = vrot.slane %v71, 1
    %vm150 = vcmp.lt.s32.totalorder %v73, 7
    %v151 = vsel %vm150, %v148, %v149
    %v152 = vsel %vm150, %v147, %v148
    %v153 = vsel %vm150, %v146, %v147
    %v154 = vsel %vm150, %v149, %v146
    %v155 = vsel %vm129, 0.0, %v153
    %v156 = vsel %vm130, 0.0, %v152
    %v157 = vsel %vm131, 0.0, %v151
    %v158 = vsel %vm132, 0.0, %v154
    %v159 = vld [vmem:[#allocation5] sm:$0xff]
    %v160 = vld [vmem:[#allocation5 + $0x8] sm:$0xff]
    %v161 = vld [vmem:[#allocation5 + $0x10] sm:$0xff]
    %v162 = vld [vmem:[#allocation5 + $0x18] sm:$0xff]
    %v163 = vld [vmem:[#allocation5 + $0x20] sm:$0xff]
    %v164 = vld [vmem:[#allocation5 + $0x28] sm:$0xff]
    %v165 = vld [vmem:[#allocation5 + $0x30] sm:$0xff]
    %v166 = vld [vmem:[#allocation5 + $0x38] sm:$0xff]
    %v167 = vld [vmem:[#allocation5 + $0x40] sm:$0xff]
    %v168 = vld [vmem:[#allocation5 + $0x48] sm:$0xff]
    %v169 = vld [vmem:[#allocation5 + $0x50] sm:$0xff]
    %v170 = vld [vmem:[#allocation5 + $0x58] sm:$0xff]
    %v171 = vld [vmem:[#allocation5 + $0x60] sm:$0xff]
    %v172 = vld [vmem:[#allocation5 + $0x68] sm:$0xff]
    %v173 = vld [vmem:[#allocation5 + $0x70] sm:$0xff]
    %v174 = vld [vmem:[#allocation5 + $0x78] sm:$0xff]
    %v175 = vld [vmem:[#allocation5 + $0x80] sm:$0xff]
    %v176 = vld [vmem:[#allocation5 + $0x88] sm:$0xff]
    %v177 = vld [vmem:[#allocation5 + $0x90] sm:$0xff]
    %v178 = vld [vmem:[#allocation5 + $0x98] sm:$0xff]
    %v179 = vld [vmem:[#allocation5 + $0xa0] sm:$0xff]
    %v180 = vld [vmem:[#allocation5 + $0xa8] sm:$0xff]
    %v181 = vld [vmem:[#allocation5 + $0xb0] sm:$0xff]
    %v182 = vld [vmem:[#allocation5 + $0xb8] sm:$0xff]
    %v183 = vld [vmem:[#allocation5 + $0xc0] sm:$0xff]
    %v184 = vld [vmem:[#allocation5 + $0xc8] sm:$0xff]
    %v185 = vld [vmem:[#allocation5 + $0xd0] sm:$0xff]
    %v186 = vld [vmem:[#allocation5 + $0xd8] sm:$0xff]
    %v187 = vld [vmem:[#allocation5 + $0xe0] sm:$0xff]
    %v188 = vld [vmem:[#allocation5 + $0xe8] sm:$0xff]
    %v189 = vld [vmem:[#allocation5 + $0xf0] sm:$0xff]
    %v190 = vld [vmem:[#allocation5 + $0xf8] sm:$0xff]
    %v191 = vld [vmem:[#allocation5 + $0x100] sm:$0xff]
    %v192 = vld [vmem:[#allocation5 + $0x108] sm:$0xff]
    %v193 = vld [vmem:[#allocation5 + $0x110] sm:$0xff]
    %v194 = vld [vmem:[#allocation5 + $0x118] sm:$0xff]
    %v195 = vld [vmem:[#allocation5 + $0x120] sm:$0xff]
    %v196 = vld [vmem:[#allocation5 + $0x128] sm:$0xff]
    %v197 = vld [vmem:[#allocation5 + $0x130] sm:$0xff]
    %v198 = vld [vmem:[#allocation5 + $0x138] sm:$0xff]
    %v199 = vld [vmem:[#allocation5 + $0x140] sm:$0xff]
    %v200 = vld [vmem:[#allocation5 + $0x148] sm:$0xff]
    %v201 = vld [vmem:[#allocation5 + $0x150] sm:$0xff]
    %v202 = vld [vmem:[#allocation5 + $0x158] sm:$0xff]
    %v203 = vld [vmem:[#allocation5 + $0x160] sm:$0xff]
    %v204 = vld [vmem:[#allocation5 + $0x168] sm:$0xff]
    %v205 = vld [vmem:[#allocation5 + $0x170] sm:$0xff]
    %v206 = vld [vmem:[#allocation5 + $0x178] sm:$0xff]
    %v207 = vld [vmem:[%s2] sm:$0x1]
    %v209 = vperm.slane %v207, 0
    %211 = vmatpush.msra.mxu0 %v174
    %212 = vmatpush.msra.mxu0 %v173
    %213 = vmatpush.msra.mxu0 %v172
    %214 = vmatpush.msra.mxu0 %v171
    %215 = vmatpush.msra.mxu0 %v170
    %216 = vmatpush.msra.mxu0 %v169
    %217 = vmatpush.msra.mxu0 %v168
    %218 = vmatpush.msra.mxu0 %v167
    %219 = vmatpush.msra.mxu0 %v166
    %220 = vmatpush.msra.mxu0 %v165
    %221 = vmatpush.msra.mxu0 %v164
    %222 = vmatpush.msra.mxu0 %v163
    %223 = vmatpush.msra.mxu0 %v162
    %224 = vmatpush.msra.mxu0 %v161
    %225 = vmatpush.msra.mxu0 %v160
    %226 = vmatpush.msra.mxu0 %v159
    %227 = vmatmul.f32.gmra.mxu0 %v142
    %v228 = vpop.f32.mrf.mxu0
    %v229 = vadd.f32 %v209, %v228
    %230 = vmatmul.f32.gmra.mxu0 %v143
    %v231 = vpop.f32.mrf.mxu0
    %v232 = vadd.f32 %v209, %v231
    %233 = vmatmul.f32.gmra.mxu0 %v144
    %v234 = vpop.f32.mrf.mxu0
    %v235 = vadd.f32 %v209, %v234
    %236 = vmatmul.f32.gmra.mxu0 %v145
    %v237 = vpop.f32.mrf.mxu0
    %v238 = vadd.f32 %v209, %v237
    %239 = vdwg.mxu0
    %240 = vmatpush.msra.mxu0 %v190
    %241 = vmatpush.msra.mxu0 %v189
    %242 = vmatpush.msra.mxu0 %v188
    %243 = vmatpush.msra.mxu0 %v187
    %244 = vmatpush.msra.mxu0 %v186
    %245 = vmatpush.msra.mxu0 %v185
    %246 = vmatpush.msra.mxu0 %v184
    %247 = vmatpush.msra.mxu0 %v183
    %248 = vmatpush.msra.mxu0 %v182
    %249 = vmatpush.msra.mxu0 %v181
    %250 = vmatpush.msra.mxu0 %v180
    %251 = vmatpush.msra.mxu0 %v179
    %252 = vmatpush.msra.mxu0 %v178
    %253 = vmatpush.msra.mxu0 %v177
    %254 = vmatpush.msra.mxu0 %v176
    %255 = vmatpush.msra.mxu0 %v175
    %256 = vmatmul.f32.gmra.mxu0 %v68
    %v257 = vpop.f32.mrf.mxu0
    %v258 = vadd.f32 %v229, %v257
    %259 = vmatmul.f32.gmra.mxu0 %v69
    %v260 = vpop.f32.mrf.mxu0
    %v261 = vadd.f32 %v232, %v260
    %262 = vmatmul.f32.gmra.mxu0 %v70
    %v263 = vpop.f32.mrf.mxu0
    %v264 = vadd.f32 %v235, %v263
    %265 = vmatmul.f32.gmra.mxu0 %v71
    %v266 = vpop.f32.mrf.mxu0
    %v267 = vadd.f32 %v238, %v266
    %268 = vdwg.mxu0
    %269 = vmatpush.msra.mxu0 %v206
    %270 = vmatpush.msra.mxu0 %v205
    %271 = vmatpush.msra.mxu0 %v204
    %272 = vmatpush.msra.mxu0 %v203
    %273 = vmatpush.msra.mxu0 %v202
    %274 = vmatpush.msra.mxu0 %v201
    %275 = vmatpush.msra.mxu0 %v200
    %276 = vmatpush.msra.mxu0 %v199
    %277 = vmatpush.msra.mxu0 %v198
    %278 = vmatpush.msra.mxu0 %v197
    %279 = vmatpush.msra.mxu0 %v196
    %280 = vmatpush.msra.mxu0 %v195
    %281 = vmatpush.msra.mxu0 %v194
    %282 = vmatpush.msra.mxu0 %v193
    %283 = vmatpush.msra.mxu0 %v192
    %284 = vmatpush.msra.mxu0 %v191
    %285 = vmatmul.f32.gmra.mxu0 %v155
    %v286 = vpop.f32.mrf.mxu0
    %v287 = vadd.f32 %v258, %v286
    %288 = vmatmul.f32.gmra.mxu0 %v156
    %v289 = vpop.f32.mrf.mxu0
    %v290 = vadd.f32 %v261, %v289
    %291 = vmatmul.f32.gmra.mxu0 %v157
    %v292 = vpop.f32.mrf.mxu0
    %v293 = vadd.f32 %v264, %v292
    %294 = vmatmul.f32.gmra.mxu0 %v158
    %v295 = vpop.f32.mrf.mxu0
    %v296 = vadd.f32 %v267, %v295
    %297 = vdwg.mxu0
    %v298 = vmax.f32 %v287, 0.0
    %v299 = vmax.f32 %v290, 0.0
    %v300 = vmax.f32 %v293, 0.0
    %v301 = vmax.f32 %v296, 0.0
    %v302 = vrot.slane %v298, 7
    %v303 = vrot.slane %v299, 7
    %v304 = vrot.slane %v300, 7
    %v305 = vrot.slane %v301, 7
    %v306 = vsel %vm137, %v304, %v305
    %v307 = vsel %vm137, %v303, %v304
    %v308 = vsel %vm137, %v302, %v303
    %v309 = vsel %vm137, %v305, %v302
    %v310 = vsel %vm125, 0.0, %v309
    %v311 = vsel %vm126, 0.0, %v308
    %v312 = vsel %vm127, 0.0, %v307
    %v313 = vsel %vm128, 0.0, %v306
    %v314 = vrot.slane %v298, 1
    %v315 = vrot.slane %v299, 1
    %v316 = vrot.slane %v300, 1
    %v317 = vrot.slane %v301, 1
    %v318 = vsel %vm150, %v316, %v317
    %v319 = vsel %vm150, %v315, %v316
    %v320 = vsel %vm150, %v314, %v315
    %v321 = vsel %vm150, %v317, %v314
    %v322 = vsel %vm129, 0.0, %v320
    %v323 = vsel %vm130, 0.0, %v319
    %v324 = vsel %vm131, 0.0, %v318
    %v325 = vsel %vm132, 0.0, %v321
    %v326 = vld [vmem:[#allocation7] sm:$0xff]
    %v327 = vld [vmem:[#allocation7 + $0x8] sm:$0xff]
    %v328 = vld [vmem:[#allocation7 + $0x10] sm:$0xff]
    %v329 = vld [vmem:[#allocation7 + $0x18] sm:$0xff]
    %v330 = vld [vmem:[#allocation7 + $0x20] sm:$0xff]
    %v331 = vld [vmem:[#allocation7 + $0x28] sm:$0xff]
    %v332 = vld [vmem:[#allocation7 + $0x30] sm:$0xff]
    %v333 = vld [vmem:[#allocation7 + $0x38] sm:$0xff]
    %v334 = vld [vmem:[#allocation7 + $0x40] sm:$0xff]
    %v335 = vld [vmem:[#allocation7 + $0x48] sm:$0xff]
    %v336 = vld [vmem:[#allocation7 + $0x50] sm:$0xff]
    %v337 = vld [vmem:[#allocation7 + $0x58] sm:$0xff]
    %v338 = vld [vmem:[#allocation7 + $0x60] sm:$0xff]
    %v339 = vld [vmem:[#allocation7 + $0x68] sm:$0xff]
    %v340 = vld [vmem:[#allocation7 + $0x70] sm:$0xff]
    %v341 = vld [vmem:[#allocation7 + $0x78] sm:$0xff]
    %v342 = vld [vmem:[#allocation7 + $0x80] sm:$0xff]
    %v343 = vld [vmem:[#allocation7 + $0x88] sm:$0xff]
    %v344 = vld [vmem:[#allocation7 + $0x90] sm:$0xff]
    %v345 = vld [vmem:[#allocation7 + $0x98] sm:$0xff]
    %v346 = vld [vmem:[#allocation7 + $0xa0] sm:$0xff]
    %v347 = vld [vmem:[#allocation7 + $0xa8] sm:$0xff]
    %v348 = vld [vmem:[#allocation7 + $0xb0] sm:$0xff]
    %v349 = vld [vmem:[#allocation7 + $0xb8] sm:$0xff]
    %v350 = vld [vmem:[#allocation7 + $0xc0] sm:$0xff]
    %v351 = vld [vmem:[#allocation7 + $0xc8] sm:$0xff]
    %v352 = vld [vmem:[#allocation7 + $0xd0] sm:$0xff]
    %v353 = vld [vmem:[#allocation7 + $0xd8] sm:$0xff]
    %v354 = vld [vmem:[#allocation7 + $0xe0] sm:$0xff]
    %v355 = vld [vmem:[#allocation7 + $0xe8] sm:$0xff]
    %v356 = vld [vmem:[#allocation7 + $0xf0] sm:$0xff]
    %v357 = vld [vmem:[#allocation7 + $0xf8] sm:$0xff]
    %v358 = vld [vmem:[#allocation7 + $0x100] sm:$0xff]
    %v359 = vld [vmem:[#allocation7 + $0x108] sm:$0xff]
    %v360 = vld [vmem:[#allocation7 + $0x110] sm:$0xff]
    %v361 = vld [vmem:[#allocation7 + $0x118] sm:$0xff]
    %v362 = vld [vmem:[#allocation7 + $0x120] sm:$0xff]
    %v363 = vld [vmem:[#allocation7 + $0x128] sm:$0xff]
    %v364 = vld [vmem:[#allocation7 + $0x130] sm:$0xff]
    %v365 = vld [vmem:[#allocation7 + $0x138] sm:$0xff]
    %v366 = vld [vmem:[#allocation7 + $0x140] sm:$0xff]
    %v367 = vld [vmem:[#allocation7 + $0x148] sm:$0xff]
    %v368 = vld [vmem:[#allocation7 + $0x150] sm:$0xff]
    %v369 = vld [vmem:[#allocation7 + $0x158] sm:$0xff]
    %v370 = vld [vmem:[#allocation7 + $0x160] sm:$0xff]
    %v371 = vld [vmem:[#allocation7 + $0x168] sm:$0xff]
    %v372 = vld [vmem:[#allocation7 + $0x170] sm:$0xff]
    %v373 = vld [vmem:[#allocation7 + $0x178] sm:$0xff]
    %v374 = vld [vmem:[%s4] sm:$0x1]
    %v376 = vperm.slane %v374, 0
    %378 = vmatpush.msra.mxu0 %v341
    %379 = vmatpush.msra.mxu0 %v340
    %380 = vmatpush.msra.mxu0 %v339
    %381 = vmatpush.msra.mxu0 %v338
    %382 = vmatpush.msra.mxu0 %v337
    %383 = vmatpush.msra.mxu0 %v336
    %384 = vmatpush.msra.mxu0 %v335
    %385 = vmatpush.msra.mxu0 %v334
    %386 = vmatpush.msra.mxu0 %v333
    %387 = vmatpush.msra.mxu0 %v332
    %388 = vmatpush.msra.mxu0 %v331
    %389 = vmatpush.msra.mxu0 %v330
    %390 = vmatpush.msra.mxu0 %v329
    %391 = vmatpush.msra.mxu0 %v328
    %392 = vmatpush.msra.mxu0 %v327
    %393 = vmatpush.msra.mxu0 %v326
    %394 = vmatmul.f32.gmra.mxu0 %v310
    %v395 = vpop.f32.mrf.mxu0
    %v396 = vadd.f32 %v376, %v395
    %397 = vmatmul.f32.gmra.mxu0 %v311
    %v398 = vpop.f32.mrf.mxu0
    %v399 = vadd.f32 %v376, %v398
    %400 = vmatmul.f32.gmra.mxu0 %v312
    %v401 = vpop.f32.mrf.mxu0
    %v402 = vadd.f32 %v376, %v401
    %403 = vmatmul.f32.gmra.mxu0 %v313
    %v404 = vpop.f32.mrf.mxu0
    %v405 = vadd.f32 %v376, %v404
    %406 = vdwg.mxu0
    %407 = vmatpush.msra.mxu0 %v357
    %408 = vmatpush.msra.mxu0 %v356
    %409 = vmatpush.msra.mxu0 %v355
    %410 = vmatpush.msra.mxu0 %v354
    %411 = vmatpush.msra.mxu0 %v353
    %412 = vmatpush.msra.mxu0 %v352
    %413 = vmatpush.msra.mxu0 %v351
    %414 = vmatpush.msra.mxu0 %v350
    %415 = vmatpush.msra.mxu0 %v349
    %416 = vmatpush.msra.mxu0 %v348
    %417 = vmatpush.msra.mxu0 %v347
    %418 = vmatpush.msra.mxu0 %v346
    %419 = vmatpush.msra.mxu0 %v345
    %420 = vmatpush.msra.mxu0 %v344
    %421 = vmatpush.msra.mxu0 %v343
    %422 = vmatpush.msra.mxu0 %v342
    %423 = vmatmul.f32.gmra.mxu0 %v298
    %v424 = vpop.f32.mrf.mxu0
    %v425 = vadd.f32 %v396, %v424
    %426 = vmatmul.f32.gmra.mxu0 %v299
    %v427 = vpop.f32.mrf.mxu0
    %v428 = vadd.f32 %v399, %v427
    %429 = vmatmul.f32.gmra.mxu0 %v300
    %v430 = vpop.f32.mrf.mxu0
    %v431 = vadd.f32 %v402, %v430
    %432 = vmatmul.f32.gmra.mxu0 %v301
    %v433 = vpop.f32.mrf.mxu0
    %v434 = vadd.f32 %v405, %v433
    %435 = vdwg.mxu0
    %436 = vmatpush.msra.mxu0 %v373
    %437 = vmatpush.msra.mxu0 %v372
    %438 = vmatpush.msra.mxu0 %v371
    %439 = vmatpush.msra.mxu0 %v370
    %440 = vmatpush.msra.mxu0 %v369
    %441 = vmatpush.msra.mxu0 %v368
    %442 = vmatpush.msra.mxu0 %v367
    %443 = vmatpush.msra.mxu0 %v366
    %444 = vmatpush.msra.mxu0 %v365
    %445 = vmatpush.msra.mxu0 %v364
    %446 = vmatpush.msra.mxu0 %v363
    %447 = vmatpush.msra.mxu0 %v362
    %448 = vmatpush.msra.mxu0 %v361
    %449 = vmatpush.msra.mxu0 %v360
    %450 = vmatpush.msra.mxu0 %v359
    %451 = vmatpush.msra.mxu0 %v358
    %452 = vmatmul.f32.gmra.mxu0 %v322
    %v453 = vpop.f32.mrf.mxu0
    %v454 = vadd.f32 %v425, %v453
    %455 = vmatmul.f32.gmra.mxu0 %v323
    %v456 = vpop.f32.mrf.mxu0
    %v457 = vadd.f32 %v428, %v456
    %458 = vmatmul.f32.gmra.mxu0 %v324
    %v459 = vpop.f32.mrf.mxu0
    %v460 = vadd.f32 %v431, %v459
    %461 = vmatmul.f32.gmra.mxu0 %v325
    %v462 = vpop.f32.mrf.mxu0
    %v463 = vadd.f32 %v434, %v462
    %464 = vdwg.mxu0
    %v465 = vadd.f32 %v68, %v454
    %v466 = vadd.f32 %v69, %v457
    %v467 = vadd.f32 %v70, %v460
    %v468 = vadd.f32 %v71, %v463
    %v469 = vmax.f32 %v465, 0.0
    %v470 = vmax.f32 %v466, 0.0
    %v471 = vmax.f32 %v467, 0.0
    %v472 = vmax.f32 %v468, 0.0
    %473 = vst [vmem:[#allocation8] sm:$0xff] %v469
    %474 = vst [vmem:[#allocation8 + $0x8] sm:$0xff] %v470
    %475 = vst [vmem:[#allocation8 + $0x10] sm:$0xff] %v471
    %476 = vst [vmem:[#allocation8 + $0x18] sm:$0xff] %v472
    // Predicated region
    $region34: #{tpu_custom_call.1} parent=1 // pred_check
      _
    $region35: #{tpu_custom_call.1} parent=1 // pred_check_branch
      %478 = sbr.rel (0) target = $region37
    $region36: #{tpu_custom_call.1} parent=1 // pred_region
      %480 = vsyncadd [#allocation4], 0
      %s481 = sshll.u32 [#allocation8], 4
      %s482 = int_to_ptr.vmem [resolvable:$true] %s481
      %s483 = sshll.u32 %s5, 4
      %s484 = int_to_ptr.hbm [resolvable:$true] %s483
      %489 = dma.vmem_to_hbm [thread:$0]  %s482, 512, %s484, [#allocation4], 128, 128, 8
    $region37: #{tpu_custom_call.1} parent=1 // pred_fallthru
      _
    // Predicated region
    $region38: #{tpu_custom_call.1} parent=1 // pred_check
      _
    $region39: #{tpu_custom_call.1} parent=1 // pred_check_branch
      %491 = sbr.rel (0) target = $region41
    $region40: #{tpu_custom_call.1} parent=1 // pred_region
      %493 = dma.done [#allocation4], 512
    $region41: #{tpu_custom_call.1} parent=1 // pred_fallthru
      _
    %494 = vsyncpa [#allocation3], 1
    %495 = vsyncpa [#allocation6], 1
    %496 = vsyncpa [#allocation4], 1

</llo_original>
